<compile_context>
chip_gen: v7x
topology: tpu7x:2x2x1
jax: 0.10.0
libtpu: 0.0.40
codegen_flags: <defaults>
</compile_context>

<pallas_src>
import functools
import math

import jax
import jax.numpy as jnp
from jax.experimental import pallas as pl
from jax.experimental.pallas import tpu as pltpu


def _rmsnorm_kernel(x_ref, w1_ref, o_ref, *, eps, inv_hidden):
    # x_ref: (block_rows, hidden)  w1_ref: (1, hidden) holding (1 + weight) in f32
    # Pass 1: per-row sum of squares, f32 accumulation. Only the (br, 1) result
    # needs to stay live across the reduction.
    xf = x_ref[...].astype(jnp.float32)
    ss = jnp.sum(xf * xf, axis=-1, keepdims=True)          # lane reduction (XLU)
    # Matches the provided module exactly: multiply by sqrt(mean + eps).
    scale = jnp.sqrt(ss * inv_hidden + eps)                 # (br, 1) f32
    # Pass 2: re-read x from the resident VMEM tile and apply scale * (1 + w)
    # in f32 (exact module semantics), then cast back to the input dtype.
    xf2 = x_ref[...].astype(jnp.float32)
    o_ref[...] = (xf2 * scale * w1_ref[...]).astype(o_ref.dtype)


def _vmem_capacity_bytes():
    try:
        return int(pltpu.get_tpu_info().vmem_capacity_bytes)
    except Exception:
        return 64 * 1024 * 1024  # conservative fallback (v7x-sized VMEM)


def _round_up(v, m):
    return ((v + m - 1) // m) * m


def _choose_block_rows(rows, hidden, itemsize, vmem_capacity, *, max_block_rows=2048):
    """Largest multiple-of-8 row tile whose pipelined buffers fit ~40% of VMEM."""
    # Per-row footprint: double-buffered input + double-buffered output tiles,
    # plus ~2 (narrow input) / ~3 (f32 input) full-width f32 temporaries in the body.
    n_f32_temps = 3 if itemsize >= 4 else 2
    per_row = hidden * (4 * itemsize + n_f32_temps * 4)
    tile_budget = int(0.40 * vmem_capacity)
    br = max(8, tile_budget // max(per_row, 1))
    br = (br // 8) * 8
    br = min(br, max_block_rows)
    # Keep >= 2 grid tiles whenever the row count allows (v7x has 2 TensorCores).
    br = min(br, max(8, _round_up(-(-rows // 2), 8)))
    return int(br)


def gemma_rms_norm(x, weight, eps, *, block_rows=None):
    """x: (..., hidden) float dtype; weight: (hidden,). Returns same shape/dtype as x."""
    orig_shape = x.shape
    hidden = orig_shape[-1]
    rows = int(math.prod(orig_shape[:-1]))
    x2d = x.reshape(rows, hidden)
    # Precompute (1 + weight) once in f32 (tiny vector; removes per-tile add/cast).
    w1 = (1.0 + weight.astype(jnp.float32)).reshape(1, hidden)

    itemsize = jnp.dtype(x.dtype).itemsize
    vmem_capacity = _vmem_capacity_bytes()
    if block_rows is None:
        block_rows = _choose_block_rows(rows, hidden, itemsize, vmem_capacity)

    # Ragged last block handled by Pallas masking: per-row reduction means the
    # unspecified padded rows cannot contaminate valid rows, and their OOB
    # output writes are discarded. No wrapper pad/slice HBM copies.
    grid = (pl.cdiv(rows, block_rows),)

    # Generation-aware scoped-VMEM budget: double-buffered in/out tiles + f32
    # temporaries + headroom, clamped to <= ~60% of physical VMEM.
    in_tile = block_rows * hidden * itemsize
    f32_tile = block_rows * hidden * 4
    n_f32_temps = 3 if itemsize >= 4 else 2
    vmem_limit = 4 * in_tile + n_f32_temps * f32_tile + (2 << 20)
    upper = max(int(0.60 * vmem_capacity), 16 * 1024 * 1024)
    vmem_limit = int(min(max(vmem_limit, 16 * 1024 * 1024), upper))

    out2d = pl.pallas_call(
        functools.partial(_rmsnorm_kernel, eps=float(eps), inv_hidden=1.0 / hidden),
        out_shape=jax.ShapeDtypeStruct((rows, hidden), x.dtype),
        grid_spec=pltpu.PrefetchScalarGridSpec(
            num_scalar_prefetch=0,
            grid=grid,
            in_specs=[
                pl.BlockSpec((block_rows, hidden), lambda i: (i, 0)),  # x tile
                pl.BlockSpec((1, hidden), lambda i: (0, 0)),           # (1+w), resident
            ],
            out_specs=pl.BlockSpec((block_rows, hidden), lambda i: (i, 0)),
        ),
        compiler_params=pltpu.CompilerParams(
            dimension_semantics=("parallel",),   # row tiles shard across TCs (v7x)
            vmem_limit_bytes=vmem_limit,
        ),
    )(x2d, w1)

    return out2d.reshape(orig_shape)


if __name__ == "__main__":
    key = jax.random.PRNGKey(0)
    kx, kw = jax.random.split(key)

    batch, seq, hidden = 2, 8, 32
    eps = 1e-6

    # Module __init__ uses zeros(dim); use small deterministic values to exercise broadcast.
    x = jax.random.normal(kx, (batch, seq, hidden), dtype=jnp.float32).astype(jnp.bfloat16)
    weight = 0.1 * jax.random.normal(kw, (hidden,), dtype=jnp.float32)

    out = gemma_rms_norm(x, weight, eps)
    out = jax.block_until_ready(out)

    # Pure-JAX reference (same formula as the provided PyTorch module).
    x_f = x.astype(jnp.float32)
    ref = x_f * jnp.sqrt(jnp.mean(x_f * x_f, axis=-1, keepdims=True) + eps)
    ref = (ref * (1.0 + weight)).astype(x.dtype)

    assert out.shape == x.shape and out.dtype == x.dtype
    assert jnp.allclose(out.astype(jnp.float32), ref.astype(jnp.float32), atol=1e-2, rtol=1e-2)
    print("KERNEL_OK")
</pallas_src>

<mosaic_0001>
module attributes {stable_mosaic.version = 11 : i64} {
  func.func @_rmsnorm_kernel(%arg0: i32, %arg1: memref<8x32xbf16, #tpu.memory_space<vmem>>, %arg2: memref<1x32xf32, #tpu.memory_space<vmem>>, %arg3: memref<8x32xbf16, #tpu.memory_space<vmem>>) attributes {dimension_semantics = [#tpu.dimension_semantics<parallel>], iteration_bounds = array<i64: 2>, scalar_prefetch = 0 : i64, scratch_operands = 0 : i64, tpu.core_type = #tpu.core_type<tc>, window_params = [{transform_indices = @transform_0, window_bounds = array<i64: 8, 32>}, {pipeline_mode = #tpu.pipeline_mode<synchronous>, transform_indices = @transform_1, window_bounds = array<i64: 1, 32>}, {transform_indices = @transform_2, window_bounds = array<i64: 8, 32>}]} {
    %c0 = arith.constant 0 : index
    %c0_0 = arith.constant 0 : index
    %0 = vector.load %arg1[%c0, %c0_0] : memref<8x32xbf16, #tpu.memory_space<vmem>>, vector<8x32xbf16>
    %1 = arith.extf %0 : vector<8x32xbf16> to vector<8x32xf32>
    %2 = arith.mulf %1, %1 : vector<8x32xf32>
    %cst = arith.constant dense<0.000000e+00> : vector<8xf32>
    %3 = vector.multi_reduction <add>, %2, %cst [1] : vector<8x32xf32> to vector<8xf32>
    %4 = vector.shape_cast %3 : vector<8xf32> to vector<8x1xf32>
    %cst_1 = arith.constant 3.125000e-02 : f32
    %5 = vector.broadcast %cst_1 : f32 to vector<8x1xf32>
    %6 = arith.mulf %4, %5 : vector<8x1xf32>
    %cst_2 = arith.constant 9.99999997E-7 : f32
    %7 = vector.broadcast %cst_2 : f32 to vector<8x1xf32>
    %8 = arith.addf %6, %7 : vector<8x1xf32>
    %9 = math.sqrt %8 : vector<8x1xf32>
    %c0_3 = arith.constant 0 : index
    %c0_4 = arith.constant 0 : index
    %10 = vector.load %arg1[%c0_3, %c0_4] : memref<8x32xbf16, #tpu.memory_space<vmem>>, vector<8x32xbf16>
    %11 = arith.extf %10 : vector<8x32xbf16> to vector<8x32xf32>
    %12 = vector.broadcast %9 : vector<8x1xf32> to vector<8x32xf32>
    %13 = arith.mulf %11, %12 : vector<8x32xf32>
    %c0_5 = arith.constant 0 : index
    %c0_6 = arith.constant 0 : index
    %14 = vector.load %arg2[%c0_5, %c0_6] : memref<1x32xf32, #tpu.memory_space<vmem>>, vector<1x32xf32>
    %15 = vector.broadcast %14 : vector<1x32xf32> to vector<8x32xf32>
    %16 = arith.mulf %13, %15 : vector<8x32xf32>
    %17 = arith.truncf %16 : vector<8x32xf32> to vector<8x32xbf16>
    %c0_7 = arith.constant 0 : index
    %c0_8 = arith.constant 0 : index
    %18 = vector.load %arg3[%c0_7, %c0_8] : memref<8x32xbf16, #tpu.memory_space<vmem>>, vector<8x32xbf16>
    tpu.vector_store %arg3[%c0_7, %c0_8], %17 {strides = array<i32>} : memref<8x32xbf16, #tpu.memory_space<vmem>>, vector<8x32xbf16>,
    return
  }
  func.func @transform_0(%arg0: i32) -> (i32, i32) {
    %c0_i32 = arith.constant 0 : i32
    %c0_i32_0 = arith.constant 0 : i32
    return %arg0, %c0_i32 : i32, i32
  }
  func.func @transform_1(%arg0: i32) -> (i32, i32) {
    %c0_i32 = arith.constant 0 : i32
    %c0_i32_0 = arith.constant 0 : i32
    %c0_i32_1 = arith.constant 0 : i32
    return %c0_i32, %c0_i32_0 : i32, i32
  }
  func.func @transform_2(%arg0: i32) -> (i32, i32) {
    %c0_i32 = arith.constant 0 : i32
    %c0_i32_0 = arith.constant 0 : i32
    return %arg0, %c0_i32 : i32, i32
  }
}

</mosaic_0001>

<llo_original>
// kernel: tpu_custom_call.1
$region0: #{tpu_custom_call.1}
  #allocation0 [shape = 'u32[]', space=smem, size = 0x4, offset = 0x4, fixed_abs, tag = 'smem constant byte address 0x4 - core index']
  #allocation1 [shape = 'u32[144,128]{1,0:T(1,128)}', space=vmem, size = 0x12000, scoped, tag = 'internal scratch']
  %s0 = inlined_call_operand.hbm [shape: bf16[16,32], index: 0, kind: input, shape index: {}]
  %s1 = inlined_call_operand.vmem [shape: f32[1,32], index: 1, kind: input, shape index: {}]
  %s2 = inlined_call_operand.hbm [shape: bf16[16,32], index: 2, kind: output, shape index: {}]
  %s3 = sld [smem:[#allocation0]]
  $region45: #{tpu_custom_call.1} parent=0
    _
  %s5 = ssub.s32 1, %s3
  %s6 = scalar_select 0, %s5, %s3
  $region1: #{tpu_custom_call.1} parent=0
    #allocation2 [shape = 'u8[4096]{0}', space=vmem, size = 0x1000, scoped, tag = 'input window, operand 0']
    #allocation3 [shape = 's32[2]{0}', space=sflag, size = 0x8, scoped, tag = 'scoped memory for tpu_custom_call.1']
    #allocation4 [shape = 's32[2]{0}', space=sflag, size = 0x8, scoped, tag = 'scoped memory for tpu_custom_call.1']
    #allocation5 [shape = 'u8[4096]{0}', space=vmem, size = 0x1000, scoped, tag = 'output window, operand 0']
    %7 = vsyncpa [#allocation3], 0
    %s8 = scalar_lea.sflag [#allocation3], 1
    %9 = vsyncpa %s8, 0
    %10 = vsyncpa [#allocation4], 0
    %s11 = scalar_lea.sflag [#allocation4], 1
    %12 = vsyncpa %s11, 0
    loop: start=0, step=1, limit=4
    $region2: #{tpu_custom_call.1} parent=1 // loop_pre_header
      _
    $region3: #{tpu_custom_call.1} parent=1 // loop_header
      %s14 = sphi 0, %s18
      %p15 = scmp.ge.s32.totalorder %s14, 4
      %s24 = sphi 0, %s26
      %s27 = sphi 0, %s24
      %s28 = sphi 0, %s27
      %s44 = sphi 0, %s28
      %s48 = sphi 0, %s48
      %s50 = sphi 0, %s48
      %s51 = sphi 0, %s50
      %s65 = sphi 0, %s51
      %s71 = sphi 0, %s73
      %s74 = sphi 0, %s71
      %s75 = sphi 0, %s74
      %s91 = sphi 0, %s75
    $region4: #{tpu_custom_call.1} parent=1 // loop_header_branch
      %17 = sbr.rel (%p15) target = $region8
    $region5: #{tpu_custom_call.1} parent=1 // loop_body
      %s19 = ssub.s32 %s14, 1
      %s20 = ssub.s32 %s14, 2
      %s21 = sadd.s32 %s14, 1
      %s22 = ssub.s32 %s14, %s21
      %p23 = scmp.eq.s32.totalorder %s22, 0
      %s25 = sadd.s32 %s24, 1
      %s26 = scalar_select %p23, %s24, %s25
      %p29 = pneg %p23
      %p30 = scmp.eq.s32.totalorder %s14, 1
      %p31 = por %p29, %p30
      %p32 = scmp.ne.s32.totalorder %s24, %s27
      %p33 = scmp.eq.s32.totalorder %s14, 0
      %p34 = por %p32, %p33
      %p35 = scmp.ne.s32.totalorder %s24, %s27
      %p36 = scmp.eq.s32.totalorder %s19, 1
      %p37 = por %p35, %p36
      %p38 = scmp.ne.s32.totalorder %s27, %s28
      %p39 = scmp.eq.s32.totalorder %s19, 0
      %p40 = por %p38, %p39
      %p41 = scmp.ne.s32.totalorder %s27, %s28
      %p42 = scmp.eq.s32.totalorder %s20, 1
      %p43 = por %p41, %p42
      %p45 = scmp.ne.s32.totalorder %s28, %s44
      %p46 = scmp.eq.s32.totalorder %s20, 0
      %p47 = por %p45, %p46
      %s49 = sadd.s32 %s48, 1
      %p52 = scmp.eq.s32.totalorder %s14, 1
      %p53 = scmp.ne.s32.totalorder %s48, %s50
      %p54 = scmp.eq.s32.totalorder %s14, 0
      %p55 = por %p53, %p54
      %p56 = scmp.ne.s32.totalorder %s48, %s50
      %p57 = scmp.eq.s32.totalorder %s19, 1
      %p58 = por %p56, %p57
      %p59 = scmp.ne.s32.totalorder %s50, %s51
      %p60 = scmp.eq.s32.totalorder %s19, 0
      %p61 = por %p59, %p60
      %p62 = scmp.ne.s32.totalorder %s50, %s51
      %p63 = scmp.eq.s32.totalorder %s20, 1
      %p64 = por %p62, %p63
      %p66 = scmp.ne.s32.totalorder %s51, %s65
      %p67 = scmp.eq.s32.totalorder %s20, 0
      %p68 = por %p66, %p67
      %s69 = ssub.s32 %s14, %s21
      %p70 = scmp.eq.s32.totalorder %s69, 0
      %s72 = sadd.s32 %s71, 1
      %s73 = scalar_select %p70, %s71, %s72
      %p76 = pneg %p70
      %p77 = scmp.eq.s32.totalorder %s14, 1
      %p78 = por %p76, %p77
      %p79 = scmp.ne.s32.totalorder %s71, %s74
      %p80 = scmp.eq.s32.totalorder %s14, 0
      %p81 = por %p79, %p80
      %p82 = scmp.ne.s32.totalorder %s71, %s74
      %p83 = scmp.eq.s32.totalorder %s19, 1
      %p84 = por %p82, %p83
      %p85 = scmp.ne.s32.totalorder %s74, %s75
      %p86 = scmp.eq.s32.totalorder %s19, 0
      %p87 = por %p85, %p86
      %p88 = scmp.ne.s32.totalorder %s74, %s75
      %p89 = scmp.eq.s32.totalorder %s20, 1
      %p90 = por %p88, %p89
      %p92 = scmp.ne.s32.totalorder %s75, %s91
      %p93 = scmp.eq.s32.totalorder %s20, 0
      %p94 = por %p92, %p93
      %p95 = scmp.le.s32.totalorder 1, %s14
      %p96 = scmp.lt.s32.totalorder %s14, 3
      %p97 = pnand %p95, %p96
      %p98 = pneg %p97
      // Predicated region
      $region9: #{tpu_custom_call.1} parent=5 // pred_check
        _
      $region10: #{tpu_custom_call.1} parent=5 // pred_check_branch
        %100 = sbr.rel (%p97) target = $region12
      $region11: #{tpu_custom_call.1} parent=5 // pred_region
        %s101 = ssub.s32 %s14, 1
        // Predicated region
        $region13: #{tpu_custom_call.1} parent=11 // pred_check
          %p102 = pneg %p61
        $region14: #{tpu_custom_call.1} parent=11 // pred_check_branch
          %104 = sbr.rel (%p102) target = $region16
        $region15: #{tpu_custom_call.1} parent=11 // pred_region
          _
        $region16: #{tpu_custom_call.1} parent=11 // pred_fallthru
          _
      $region12: #{tpu_custom_call.1} parent=5 // pred_fallthru
        _
      %p105 = scmp.lt.s32.totalorder %s14, 2
      // Predicated region
      $region17: #{tpu_custom_call.1} parent=5 // pred_check
        %p106 = pneg %p105
      $region18: #{tpu_custom_call.1} parent=5 // pred_check_branch
        %108 = sbr.rel (%p106) target = $region20
      $region19: #{tpu_custom_call.1} parent=5 // pred_region
        // Predicated region
        $region21: #{tpu_custom_call.1} parent=19 // pred_check
          %p109 = pneg %p34
        $region22: #{tpu_custom_call.1} parent=19 // pred_check_branch
          %111 = sbr.rel (%p109) target = $region24
        $region23: #{tpu_custom_call.1} parent=19 // pred_region
          %s112 = sand.u32 %s24, 1
          %s113 = scalar_lea.sflag [#allocation3], %s112
          %s114 = sand.u32 %s24, 1
          %s115 = smul.addr %s114, 4
          %s116 = scalar_lea.vmem [#allocation2], %s115
          %s118 = ssub.s32 64, 64
          %119 = vsyncadd %s113, %s118
          %s120 = smul.addr %s14, 64
          %s121 = scalar_lea.hbm %s0, %s120
          %s123 = sshll.u32 %s116, 4
          %s124 = int_to_ptr.vmem [resolvable:$true] %s123
          %126 = dma.hbm_to_vmem [thread:$0]  %s121, 64, %s124, %s113
        $region24: #{tpu_custom_call.1} parent=19 // pred_fallthru
          _
      $region20: #{tpu_custom_call.1} parent=5 // pred_fallthru
        _
      %p127 = scmp.le.s32.totalorder 1, %s14
      %p128 = scmp.lt.s32.totalorder %s14, 3
      %p129 = pnand %p127, %p128
      %p130 = pneg %p129
      // Predicated region
      $region25: #{tpu_custom_call.1} parent=5 // pred_check
        _
      $region26: #{tpu_custom_call.1} parent=5 // pred_check_branch
        %132 = sbr.rel (%p129) target = $region28
      $region27: #{tpu_custom_call.1} parent=5 // pred_region
        %s133 = ssub.s32 %s14, 1
        %s134 = sand.u32 %s27, 1
        %s135 = scalar_lea.sflag [#allocation3], %s134
        %s136 = sand.u32 %s27, 1
        %s137 = smul.addr %s136, 4
        %s138 = scalar_lea.vmem [#allocation2], %s137
        // Predicated region
        $region29: #{tpu_custom_call.1} parent=27 // pred_check
          %p139 = pneg %p40
        $region30: #{tpu_custom_call.1} parent=27 // pred_check_branch
          %141 = sbr.rel (%p139) target = $region32
        $region31: #{tpu_custom_call.1} parent=27 // pred_region
          %142 = dma.done %s135, 64
        $region32: #{tpu_custom_call.1} parent=27 // pred_fallthru
          _
        %s143 = sand.u32 %s27, 1
        %s144 = scalar_lea.sflag [#allocation3], %s143
        %s145 = sand.u32 %s27, 1
        %s146 = smul.addr %s145, 4
        %s147 = scalar_lea.vmem [#allocation2], %s146
        %p148 = pneg %p40
        %p149 = pneg %p37
        %p150 = pneg %p61
        %p151 = pneg %p58
        %p152 = pneg %p87
        %p153 = pneg %p84
        %s154 = sand.u32 %s74, 1
        %s155 = scalar_lea.sflag [#allocation4], %s154
        %s156 = sand.u32 %s74, 1
        %s157 = smul.addr %s156, 4
        %s158 = scalar_lea.vmem [#allocation5], %s157
        %v159 = vld [vmem:[%s138] sm:$0xf]
        %v160 = vunpack.c.l.bf16 %v159
        %v161 = vmul.f32 %v160, %v160
        %vm162 = vcmask 261120
        %v163 = vsel %vm162, %v161, 0.0
        %164 = vadd.xlane.f32.xlu0 %v163
        %v165 = vpop.xlane.xlu0 %164
        %v166 = vmul.f32 %v165, 0.03125
        %v167 = vadd.f32 %v166, 1e-06
        %v168 = vrsqrt.pop %v167
        %v169 = vmul.f32 %v167, %v168
        %vm170 = vcmp.eq.f32.partialorder %v167, inf
        %v171 = vsel %vm170, %v167, %v169
        %vm172 = vcmp.eq.f32.partialorder %v167, 0.0
        %v173 = vand.u32 %v167, 2147483648
        %v174 = vsel %vm172, %v173, %v171
        %v175 = vmul.f32 %v160, %v174
        %v176 = vld [vmem:[%s1] sm:$0x1]
        %v178 = vlaneseq
        %v179 = vshrl.u32 %v178, 7
        %v180 = vsub.s32 0, %v179
        %v181 = vrot.slane %v176, %v180
        %v183 = vmul.f32 %v175, %v181
        %v184 = vpack.c.bf16 %v183, %v183
        %vm185 = vcmask 257024
        %186 = vst.msk [vmem:[%s158] sm:$0xf] %vm185, %v184
        %s187 = sand.u32 %s74, 1
        %s188 = scalar_lea.sflag [#allocation4], %s187
        %s189 = sand.u32 %s74, 1
        %s190 = smul.addr %s189, 4
        %s191 = scalar_lea.vmem [#allocation5], %s190
        // Predicated region
        $region33: #{tpu_custom_call.1} parent=27 // pred_check
          %p192 = pneg %p84
        $region34: #{tpu_custom_call.1} parent=27 // pred_check_branch
          %194 = sbr.rel (%p192) target = $region36
        $region35: #{tpu_custom_call.1} parent=27 // pred_region
          %s196 = ssub.s32 64, 64
          %197 = vsyncadd %s188, %s196
          %s198 = smul.addr %s19, 64
          %s199 = scalar_lea.hbm %s2, %s198
          %s201 = sshll.u32 %s191, 4
          %s202 = int_to_ptr.vmem [resolvable:$true] %s201
          %204 = dma.vmem_to_hbm [thread:$0]  %s202, 64, %s199, %s188
        $region36: #{tpu_custom_call.1} parent=27 // pred_fallthru
          _
      $region28: #{tpu_custom_call.1} parent=5 // pred_fallthru
        _
      %p205 = scmp.le.s32.totalorder 2, %s14
      // Predicated region
      $region37: #{tpu_custom_call.1} parent=5 // pred_check
        %p206 = pneg %p205
      $region38: #{tpu_custom_call.1} parent=5 // pred_check_branch
        %208 = sbr.rel (%p206) target = $region40
      $region39: #{tpu_custom_call.1} parent=5 // pred_region
        %s209 = ssub.s32 %s14, 2
        // Predicated region
        $region41: #{tpu_custom_call.1} parent=39 // pred_check
          %p210 = pneg %p90
        $region42: #{tpu_custom_call.1} parent=39 // pred_check_branch
          %212 = sbr.rel (%p210) target = $region44
        $region43: #{tpu_custom_call.1} parent=39 // pred_region
          %s213 = sand.u32 %s75, 1
          %s214 = scalar_lea.sflag [#allocation4], %s213
          %s215 = sand.u32 %s75, 1
          %s216 = smul.addr %s215, 4
          %s217 = scalar_lea.vmem [#allocation5], %s216
          %218 = dma.done %s214, 64
        $region44: #{tpu_custom_call.1} parent=39 // pred_fallthru
          _
      $region40: #{tpu_custom_call.1} parent=5 // pred_fallthru
        _
    $region6: #{tpu_custom_call.1} parent=1 // loop_footer
      %s18 = sadd.s32 1, %s14
    $region7: #{tpu_custom_call.1} parent=1 // loop_footer_branch
      %13 = sbr.rel target = $region3
    $region8: #{tpu_custom_call.1} parent=1 // loop_exit
      _
    %219 = vsyncpa [#allocation3], 1
    %s220 = scalar_lea.sflag [#allocation3], 1
    %221 = vsyncpa %s220, 1
    %222 = vsyncpa [#allocation4], 1
    %s223 = scalar_lea.sflag [#allocation4], 1
    %224 = vsyncpa %s223, 1

</llo_original>
